<compile_context>
chip_gen: v7x
topology: tpu7x:2x2x1
jax: 0.10.0
libtpu: 0.0.40
codegen_flags: <defaults>
</compile_context>

<pallas_src>
import functools

import jax
import jax.numpy as jnp
from jax.experimental import pallas as pl
from jax.experimental.pallas import tpu as pltpu

_LANES = 128


def _tensorcores_per_chip():
    """TensorCores addressable per JAX device: 2 on v7x and megacore (v4/v5p),
    1 on v5e/v6e.  Unknown kinds fall back to 1, which is always correct (the
    core-split grid axis simply stays at size 1)."""
    try:
        kind = jax.devices()[0].device_kind.lower()
    except Exception:
        return 1
    if "lite" in kind or "v5e" in kind or "v6e" in kind:
        return 1  # single-TensorCore chips
    if "v4" in kind or "v5p" in kind or kind.rstrip().endswith("v5") or "7" in kind:
        return 2  # megacore (v4/v5p) and v7x expose 2 TCs per device
    return 1


def _wl1_kernel(out_ref, tgt_ref, w_ref, loss_ref, cnt_ref, *,
                block_rows, lane_w, valid_rows, steps_per_core):
    c = pl.program_id(0)          # core-split ("parallel") axis
    i = pl.program_id(1)          # streaming reduction ("arbitrary") axis

    @pl.when(i == 0)
    def _init():
        loss_ref[...] = jnp.zeros_like(loss_ref)
        cnt_ref[...] = jnp.zeros_like(cnt_ref)

    def accumulate(l1w, pos):
        if block_rows % 8 == 0:
            # (rows, L) -> (rows//8, 8, L) regroups whole vreg tiles; the
            # axis-0 sum is pure cross-vreg vadds (no XLU) onto the resident
            # (8, L) accumulator block.
            loss_ref[...] += l1w.reshape(-1, 8, lane_w).sum(axis=0)
            cnt_ref[...] += pos.reshape(-1, 8, lane_w).sum(axis=0)
        else:
            # Tiny-array fallback (single block whose row count isn't 8-aligned).
            loss_ref[0:1, :] += l1w.sum(axis=0, keepdims=True)
            cnt_ref[0:1, :] += pos.sum(axis=0, keepdims=True)

    # Unclamped global block index: decides whether any masking is needed
    # (ragged last block, or the clamped/duplicated block on the 2-TC split).
    blk = c * steps_per_core + i
    rows_left = valid_rows - blk * block_rows
    needs_mask = rows_left < block_rows

    @pl.when(jnp.logical_not(needs_mask))
    def _full_block():                      # interior block: zero mask overhead
        o = out_ref[...].astype(jnp.float32)
        t = tgt_ref[...].astype(jnp.float32)
        w = w_ref[...].astype(jnp.float32)
        accumulate(jnp.abs(o - t) * w, (w > 0.0).astype(jnp.int32))

    @pl.when(needs_mask)
    def _edge_block():                      # mask rows past the valid range
        o = out_ref[...].astype(jnp.float32)
        t = tgt_ref[...].astype(jnp.float32)
        w = w_ref[...].astype(jnp.float32)
        row_ids = jax.lax.broadcasted_iota(jnp.int32, (block_rows, lane_w), 0)
        valid = row_ids < rows_left
        # where-select (not multiply-by-mask) so garbage in the clipped region
        # (even NaN/Inf) can never leak into the accumulators.
        l1w = jnp.where(valid, jnp.abs(o - t) * w, 0.0)
        pos = (valid & (w > 0.0)).astype(jnp.int32)
        accumulate(l1w, pos)


def weighted_l1_loss(out, target, weight, *, block_rows=4096, num_cores=None):
    """Pallas TPU implementation of Weighted_L1_Loss.forward.

    Assumes weight >= 0 (the PyTorch module asserts this host-side).
    """
    # TODO(synk): PyTorch's `assert (weight >= 0).all()` host-side runtime
    # assert is not reproduced; non-negative weights are assumed.
    n = out.size
    if n == 0:
        return jnp.zeros((), jnp.float32)

    # Zero-copy 2-D streaming view:
    #  * numel % 128 == 0 -> flat (numel/128, 128): fully lane-dense tiles.
    #  * otherwise        -> native (prod(leading dims), last dim) view; the
    #    trailing dim becomes the lane dim (block last dim == full dim), so no
    #    jnp.pad / slice copies are ever materialized.
    if n % _LANES == 0:
        rows, lane_w = n // _LANES, _LANES
    else:
        lane_w = out.shape[-1] if out.ndim else 1
        rows = max(n // lane_w, 1)

    def view(x):
        return x.reshape(rows, lane_w)      # free for contiguous inputs

    o2, t2, w2 = view(out), view(target), view(weight)

    # Tile sizing: ~block_rows*128 elements (~2 MiB f32 at the default 4096),
    # rows rounded to a multiple of 8 unless the whole array fits in one block.
    budget_rows = max(1, (block_rows * _LANES) // lane_w)
    if budget_rows >= rows:
        eff_rows = rows
    else:
        eff_rows = max(8, (budget_rows // 8) * 8)
    num_blocks = pl.cdiv(rows, eff_rows)

    # Split across TensorCores only where they exist and only if there is more
    # than one block to split.
    if num_cores is None:
        num_cores = _tensorcores_per_chip()
    num_cores = max(1, min(num_cores, num_blocks))
    steps = pl.cdiv(num_blocks, num_cores)

    def in_map(c, i):
        # Never request a block starting outside the array; duplicated/ragged
        # blocks are zeroed by the kernel's row mask (which uses the UNCLAMPED
        # index), so this clamp is correctness-neutral.
        return (jnp.minimum(c * steps + i, num_blocks - 1), 0)

    def out_map(c, i):
        return (c, 0)

    kernel = functools.partial(_wl1_kernel, block_rows=eff_rows, lane_w=lane_w,
                               valid_rows=rows, steps_per_core=steps)

    # Explicit scoped-VMEM budget: 3 double-buffered input tiles + headroom for
    # elementwise f32 temporaries + margin (~37 MiB at the f32 defaults: above
    # v5e's 16 MiB scoped default, comfortably below v7x's 64 MiB physical).
    tile_elems = eff_rows * lane_w
    in_bytes = sum(2 * tile_elems * x.dtype.itemsize for x in (o2, t2, w2))
    vmem_limit = int(in_bytes + 10 * tile_elems * 4 + (4 << 20))
    vmem_limit = min(max(vmem_limit, 16 << 20), 48 << 20)

    loss_parts, cnt_parts = pl.pallas_call(
        kernel,
        out_shape=(jax.ShapeDtypeStruct((num_cores * 8, lane_w), jnp.float32),
                   jax.ShapeDtypeStruct((num_cores * 8, lane_w), jnp.int32)),
        grid_spec=pltpu.PrefetchScalarGridSpec(
            num_scalar_prefetch=0,
            grid=(num_cores, steps),
            in_specs=[pl.BlockSpec((eff_rows, lane_w), in_map),
                      pl.BlockSpec((eff_rows, lane_w), in_map),
                      pl.BlockSpec((eff_rows, lane_w), in_map)],
            out_specs=[pl.BlockSpec((8, lane_w), out_map),
                       pl.BlockSpec((8, lane_w), out_map)],
        ),
        compiler_params=pltpu.CompilerParams(
            dimension_semantics=("parallel", "arbitrary"),
            vmem_limit_bytes=vmem_limit),
    )(o2, t2, w2)

    loss_sum = jnp.sum(loss_parts, dtype=jnp.float32)
    # int32 per-lane counts are exact; the final cross-lane reduce is f32.
    pos_cnt = jnp.sum(cnt_parts.astype(jnp.float32))
    # weight >= 0  =>  (weight.sum() > 0) <=> (count(weight > 0) > 0)
    return jnp.where(pos_cnt > 0, loss_sum / jnp.maximum(pos_cnt, 1.0), 0.0)


if __name__ == "__main__":
    def ref_loss(o, t, w):
        l1 = jnp.abs(o - t) * w
        return jnp.where(w.sum() > 0,
                         l1.sum() / (w > 0).astype(jnp.float32).sum(),
                         0.0)

    # 1) standard NCHW offset-map style input (single full, unmasked block)
    k1, k2, k3 = jax.random.split(jax.random.PRNGKey(0), 3)
    B, C, H, W = 2, 4, 16, 16
    out = jax.random.normal(k1, (B, C, H, W), dtype=jnp.float32)
    target = jax.random.normal(k2, (B, C, H, W), dtype=jnp.float32)
    weight = jnp.maximum(jax.random.normal(k3, (B, C, H, W), dtype=jnp.float32), 0.0)

    loss = jax.block_until_ready(weighted_l1_loss(out, target, weight))
    ref = ref_loss(out, target, weight)
    assert jnp.allclose(loss, ref, rtol=1e-5, atol=1e-6), (loss, ref)

    # 2) zero-weight path -> 0
    loss0 = jax.block_until_ready(weighted_l1_loss(out, target, jnp.zeros_like(weight)))
    assert jnp.allclose(loss0, 0.0), loss0

    # 3) multiple blocks, odd block count (exercises multi-step streaming and,
    #    on 2-TC chips, the clamped/duplicated-block masking)
    k4, k5, k6 = jax.random.split(jax.random.PRNGKey(1), 3)
    o3 = jax.random.normal(k4, (2, 4, 16, 24), dtype=jnp.float32)
    t3 = jax.random.normal(k5, (2, 4, 16, 24), dtype=jnp.float32)
    w3 = jnp.maximum(jax.random.normal(k6, (2, 4, 16, 24), dtype=jnp.float32), 0.0)
    loss3 = jax.block_until_ready(weighted_l1_loss(o3, t3, w3, block_rows=8))
    ref3 = ref_loss(o3, t3, w3)
    assert jnp.allclose(loss3, ref3, rtol=1e-5, atol=1e-6), (loss3, ref3)

    # 4) block rows that do NOT divide the row count (exercises the in-kernel
    #    ragged-tail mask on the clipped last block)
    k7, k8, k9 = jax.random.split(jax.random.PRNGKey(2), 3)
    o4 = jax.random.normal(k7, (2, 4, 16, 20), dtype=jnp.float32)
    t4 = jax.random.normal(k8, (2, 4, 16, 20), dtype=jnp.float32)
    w4 = jnp.maximum(jax.random.normal(k9, (2, 4, 16, 20), dtype=jnp.float32), 0.0)
    loss4 = jax.block_until_ready(weighted_l1_loss(o4, t4, w4, block_rows=8))
    ref4 = ref_loss(o4, t4, w4)
    assert jnp.allclose(loss4, ref4, rtol=1e-5, atol=1e-6), (loss4, ref4)

    # 5) ragged numel (not a multiple of 128) + bf16 inputs: streams the native
    #    (prod(leading dims), last-dim) view with zero padding/copies
    ka, kb, kc = jax.random.split(jax.random.PRNGKey(3), 3)
    o5 = jax.random.normal(ka, (2, 3, 17, 19), dtype=jnp.bfloat16)
    t5 = jax.random.normal(kb, (2, 3, 17, 19), dtype=jnp.bfloat16)
    w5 = jnp.maximum(jax.random.normal(kc, (2, 3, 17, 19), dtype=jnp.bfloat16), 0.0)
    loss5 = jax.block_until_ready(weighted_l1_loss(o5, t5, w5))
    ref5 = ref_loss(o5.astype(jnp.float32), t5.astype(jnp.float32),
                    w5.astype(jnp.float32))
    assert jnp.allclose(loss5, ref5, rtol=1e-4, atol=1e-4), (loss5, ref5)

    print("KERNEL_OK")
</pallas_src>

<mosaic_0001>
module attributes {stable_mosaic.version = 11 : i64} {
  func.func @_wl1_kernel(%arg0: i32, %arg1: i32, %arg2: memref<16x128xf32, #tpu.memory_space<vmem>>, %arg3: memref<16x128xf32, #tpu.memory_space<vmem>>, %arg4: memref<16x128xf32, #tpu.memory_space<vmem>>, %arg5: memref<8x128xf32, #tpu.memory_space<vmem>>, %arg6: memref<8x128xi32, #tpu.memory_space<vmem>>) attributes {dimension_semantics = [#tpu.dimension_semantics<parallel>, #tpu.dimension_semantics<arbitrary>], iteration_bounds = array<i64: 1, 1>, scalar_prefetch = 0 : i64, scratch_operands = 0 : i64, tpu.core_type = #tpu.core_type<tc>, window_params = [{transform_indices = @transform_0, window_bounds = array<i64: 16, 128>}, {transform_indices = @transform_1, window_bounds = array<i64: 16, 128>}, {transform_indices = @transform_2, window_bounds = array<i64: 16, 128>}, {transform_indices = @transform_3, window_bounds = array<i64: 8, 128>}, {transform_indices = @transform_4, window_bounds = array<i64: 8, 128>}]} {
    %c0_i32 = arith.constant 0 : i32
    %0 = arith.cmpi eq, %arg1, %c0_i32 : i32
    %1 = arith.extui %0 : i1 to i32
    %c0_i32_0 = arith.constant 0 : i32
    %2 = arith.cmpi ne, %1, %c0_i32_0 : i32
    scf.if %2 {
      %cst = arith.constant 0.000000e+00 : f32
      %13 = vector.broadcast %cst : f32 to vector<8x128xf32>
      %c0 = arith.constant 0 : index
      %c0_5 = arith.constant 0 : index
      %14 = vector.load %arg5[%c0, %c0_5] : memref<8x128xf32, #tpu.memory_space<vmem>>, vector<8x128xf32>
      tpu.vector_store %arg5[%c0, %c0_5], %13 {strides = array<i32>} : memref<8x128xf32, #tpu.memory_space<vmem>>, vector<8x128xf32>,
      %c0_i32_6 = arith.constant 0 : i32
      %15 = vector.broadcast %c0_i32_6 : i32 to vector<8x128xi32>
      %c0_7 = arith.constant 0 : index
      %c0_8 = arith.constant 0 : index
      %16 = vector.load %arg6[%c0_7, %c0_8] : memref<8x128xi32, #tpu.memory_space<vmem>>, vector<8x128xi32>
      tpu.vector_store %arg6[%c0_7, %c0_8], %15 {strides = array<i32>} : memref<8x128xi32, #tpu.memory_space<vmem>>, vector<8x128xi32>,
    } else {
    }
    %c1_i32 = arith.constant 1 : i32
    %3 = arith.muli %arg0, %c1_i32 : i32
    %4 = arith.addi %3, %arg1 : i32
    %c16_i32 = arith.constant 16 : i32
    %5 = arith.muli %4, %c16_i32 : i32
    %c16_i32_1 = arith.constant 16 : i32
    %6 = arith.subi %c16_i32_1, %5 : i32
    %c16_i32_2 = arith.constant 16 : i32
    %7 = arith.cmpi slt, %6, %c16_i32_2 : i32
    %true = arith.constant true
    %8 = arith.xori %7, %true : i1
    %9 = arith.extui %8 : i1 to i32
    %c0_i32_3 = arith.constant 0 : i32
    %10 = arith.cmpi ne, %9, %c0_i32_3 : i32
    scf.if %10 {
      %c0 = arith.constant 0 : index
      %c0_5 = arith.constant 0 : index
      %13 = vector.load %arg2[%c0, %c0_5] : memref<16x128xf32, #tpu.memory_space<vmem>>, vector<16x128xf32>
      %c0_6 = arith.constant 0 : index
      %c0_7 = arith.constant 0 : index
      %14 = vector.load %arg3[%c0_6, %c0_7] : memref<16x128xf32, #tpu.memory_space<vmem>>, vector<16x128xf32>
      %c0_8 = arith.constant 0 : index
      %c0_9 = arith.constant 0 : index
      %15 = vector.load %arg4[%c0_8, %c0_9] : memref<16x128xf32, #tpu.memory_space<vmem>>, vector<16x128xf32>
      %16 = arith.subf %13, %14 : vector<16x128xf32>
      %17 = math.absf %16 : vector<16x128xf32>
      %18 = arith.mulf %17, %15 : vector<16x128xf32>
      %cst = arith.constant 0.000000e+00 : f32
      %19 = vector.broadcast %cst : f32 to vector<16x128xf32>
      %20 = arith.cmpf ogt, %15, %19 : vector<16x128xf32>
      %21 = arith.extui %20 : vector<16x128xi1> to vector<16x128xi32>
      %c0_10 = arith.constant 0 : index
      %c0_11 = arith.constant 0 : index
      %22 = vector.load %arg5[%c0_10, %c0_11] : memref<8x128xf32, #tpu.memory_space<vmem>>, vector<8x128xf32>
      %23 = vector.shape_cast %18 : vector<16x128xf32> to vector<2x8x128xf32>
      %cst_12 = arith.constant dense<0.000000e+00> : vector<8x128xf32>
      %24 = vector.multi_reduction <add>, %23, %cst_12 [0] : vector<2x8x128xf32> to vector<8x128xf32>
      %25 = arith.addf %22, %24 : vector<8x128xf32>
      %c0_13 = arith.constant 0 : index
      %c0_14 = arith.constant 0 : index
      %26 = vector.load %arg5[%c0_13, %c0_14] : memref<8x128xf32, #tpu.memory_space<vmem>>, vector<8x128xf32>
      tpu.vector_store %arg5[%c0_13, %c0_14], %25 {strides = array<i32>} : memref<8x128xf32, #tpu.memory_space<vmem>>, vector<8x128xf32>,
      %c0_15 = arith.constant 0 : index
      %c0_16 = arith.constant 0 : index
      %27 = vector.load %arg6[%c0_15, %c0_16] : memref<8x128xi32, #tpu.memory_space<vmem>>, vector<8x128xi32>
      %28 = vector.shape_cast %21 : vector<16x128xi32> to vector<2x8x128xi32>
      %cst_17 = arith.constant dense<0> : vector<8x128xi32>
      %29 = vector.multi_reduction <add>, %28, %cst_17 [0] : vector<2x8x128xi32> to vector<8x128xi32>
      %30 = arith.addi %27, %29 : vector<8x128xi32>
      %c0_18 = arith.constant 0 : index
      %c0_19 = arith.constant 0 : index
      %31 = vector.load %arg6[%c0_18, %c0_19] : memref<8x128xi32, #tpu.memory_space<vmem>>, vector<8x128xi32>
      tpu.vector_store %arg6[%c0_18, %c0_19], %30 {strides = array<i32>} : memref<8x128xi32, #tpu.memory_space<vmem>>, vector<8x128xi32>,
    } else {
    }
    %11 = arith.extui %7 : i1 to i32
    %c0_i32_4 = arith.constant 0 : i32
    %12 = arith.cmpi ne, %11, %c0_i32_4 : i32
    scf.if %12 {
      %c0 = arith.constant 0 : index
      %c0_5 = arith.constant 0 : index
      %13 = vector.load %arg2[%c0, %c0_5] : memref<16x128xf32, #tpu.memory_space<vmem>>, vector<16x128xf32>
      %c0_6 = arith.constant 0 : index
      %c0_7 = arith.constant 0 : index
      %14 = vector.load %arg3[%c0_6, %c0_7] : memref<16x128xf32, #tpu.memory_space<vmem>>, vector<16x128xf32>
      %c0_8 = arith.constant 0 : index
      %c0_9 = arith.constant 0 : index
      %15 = vector.load %arg4[%c0_8, %c0_9] : memref<16x128xf32, #tpu.memory_space<vmem>>, vector<16x128xf32>
      %16 = tpu.iota {dimensions = array<i32: 0>} : vector<16x128xi32>
      %17 = vector.broadcast %6 : i32 to vector<16x128xi32>
      %18 = arith.cmpi slt, %16, %17 : vector<16x128xi32>
      %19 = arith.subf %13, %14 : vector<16x128xf32>
      %20 = math.absf %19 : vector<16x128xf32>
      %21 = arith.mulf %20, %15 : vector<16x128xf32>
      %cst = arith.constant 0.000000e+00 : f32
      %22 = vector.broadcast %cst : f32 to vector<16x128xf32>
      %23 = arith.select %18, %21, %22 : vector<16x128xi1>, vector<16x128xf32>
      %cst_10 = arith.constant 0.000000e+00 : f32
      %24 = vector.broadcast %cst_10 : f32 to vector<16x128xf32>
      %25 = arith.cmpf ogt, %15, %24 : vector<16x128xf32>
      %26 = arith.andi %18, %25 : vector<16x128xi1>
      %27 = arith.extui %26 : vector<16x128xi1> to vector<16x128xi32>
      %c0_11 = arith.constant 0 : index
      %c0_12 = arith.constant 0 : index
      %28 = vector.load %arg5[%c0_11, %c0_12] : memref<8x128xf32, #tpu.memory_space<vmem>>, vector<8x128xf32>
      %29 = vector.shape_cast %23 : vector<16x128xf32> to vector<2x8x128xf32>
      %cst_13 = arith.constant dense<0.000000e+00> : vector<8x128xf32>
      %30 = vector.multi_reduction <add>, %29, %cst_13 [0] : vector<2x8x128xf32> to vector<8x128xf32>
      %31 = arith.addf %28, %30 : vector<8x128xf32>
      %c0_14 = arith.constant 0 : index
      %c0_15 = arith.constant 0 : index
      %32 = vector.load %arg5[%c0_14, %c0_15] : memref<8x128xf32, #tpu.memory_space<vmem>>, vector<8x128xf32>
      tpu.vector_store %arg5[%c0_14, %c0_15], %31 {strides = array<i32>} : memref<8x128xf32, #tpu.memory_space<vmem>>, vector<8x128xf32>,
      %c0_16 = arith.constant 0 : index
      %c0_17 = arith.constant 0 : index
      %33 = vector.load %arg6[%c0_16, %c0_17] : memref<8x128xi32, #tpu.memory_space<vmem>>, vector<8x128xi32>
      %34 = vector.shape_cast %27 : vector<16x128xi32> to vector<2x8x128xi32>
      %cst_18 = arith.constant dense<0> : vector<8x128xi32>
      %35 = vector.multi_reduction <add>, %34, %cst_18 [0] : vector<2x8x128xi32> to vector<8x128xi32>
      %36 = arith.addi %33, %35 : vector<8x128xi32>
      %c0_19 = arith.constant 0 : index
      %c0_20 = arith.constant 0 : index
      %37 = vector.load %arg6[%c0_19, %c0_20] : memref<8x128xi32, #tpu.memory_space<vmem>>, vector<8x128xi32>
      tpu.vector_store %arg6[%c0_19, %c0_20], %36 {strides = array<i32>} : memref<8x128xi32, #tpu.memory_space<vmem>>, vector<8x128xi32>,
    } else {
    }
    return
  }
  func.func @transform_0(%arg0: i32, %arg1: i32) -> (i32, i32) {
    %c1_i32 = arith.constant 1 : i32
    %0 = arith.muli %arg0, %c1_i32 : i32
    %1 = arith.addi %0, %arg1 : i32
    %c0_i32 = arith.constant 0 : i32
    %2 = arith.minsi %1, %c0_i32 : i32
    %c0_i32_0 = arith.constant 0 : i32
    %c0_i32_1 = arith.constant 0 : i32
    return %2, %c0_i32_0 : i32, i32
  }
  func.func @transform_1(%arg0: i32, %arg1: i32) -> (i32, i32) {
    %c1_i32 = arith.constant 1 : i32
    %0 = arith.muli %arg0, %c1_i32 : i32
    %1 = arith.addi %0, %arg1 : i32
    %c0_i32 = arith.constant 0 : i32
    %2 = arith.minsi %1, %c0_i32 : i32
    %c0_i32_0 = arith.constant 0 : i32
    %c0_i32_1 = arith.constant 0 : i32
    return %2, %c0_i32_0 : i32, i32
  }
  func.func @transform_2(%arg0: i32, %arg1: i32) -> (i32, i32) {
    %c1_i32 = arith.constant 1 : i32
    %0 = arith.muli %arg0, %c1_i32 : i32
    %1 = arith.addi %0, %arg1 : i32
    %c0_i32 = arith.constant 0 : i32
    %2 = arith.minsi %1, %c0_i32 : i32
    %c0_i32_0 = arith.constant 0 : i32
    %c0_i32_1 = arith.constant 0 : i32
    return %2, %c0_i32_0 : i32, i32
  }
  func.func @transform_3(%arg0: i32, %arg1: i32) -> (i32, i32) {
    %c0_i32 = arith.constant 0 : i32
    %c0_i32_0 = arith.constant 0 : i32
    return %arg0, %c0_i32 : i32, i32
  }
  func.func @transform_4(%arg0: i32, %arg1: i32) -> (i32, i32) {
    %c0_i32 = arith.constant 0 : i32
    %c0_i32_0 = arith.constant 0 : i32
    return %arg0, %c0_i32 : i32, i32
  }
}

</mosaic_0001>

<llo_original>
// kernel: tpu_custom_call.1
$region0: #{tpu_custom_call.1}
  #allocation0 [shape = 'u32[]', space=smem, size = 0x4, offset = 0x4, fixed_abs, tag = 'smem constant byte address 0x4 - core index']
  #allocation1 [shape = 'u32[144,128]{1,0:T(1,128)}', space=vmem, size = 0x12000, scoped, tag = 'internal scratch']
  %s0 = inlined_call_operand.hbm [shape: f32[16,128], index: 0, kind: input, shape index: {}]
  %s1 = inlined_call_operand.hbm [shape: f32[16,128], index: 1, kind: input, shape index: {}]
  %s2 = inlined_call_operand.hbm [shape: f32[16,128], index: 2, kind: input, shape index: {}]
  %s3 = inlined_call_operand.hbm [shape: f32[8,128], index: 3, kind: output, shape index: {0}]
  %s4 = inlined_call_operand.hbm [shape: s32[8,128], index: 4, kind: output, shape index: {1}]
  %5 = xla_tuple %s3, %s4
  %s6 = sld [smem:[#allocation0]]
  $region54: #{tpu_custom_call.1} parent=0
    _
  %s8 = ssub.s32 1, %s6
  %s9 = scalar_select 0, %s8, %s6
  $region1: #{tpu_custom_call.1} parent=0
    #allocation2 [shape = 'u8[8192]{0}', space=vmem, size = 0x2000, scoped, tag = 'input window, operand 0, single buffered']
    #allocation3 [shape = 's32[1]{0}', space=sflag, size = 0x4, scoped, tag = 'scoped memory for tpu_custom_call.1']
    #allocation4 [shape = 's32[1]{0}', space=sflag, size = 0x4, scoped, tag = 'scoped memory for tpu_custom_call.1']
    #allocation5 [shape = 'u8[8192]{0}', space=vmem, size = 0x2000, scoped, tag = 'input window, operand 1, single buffered']
    #allocation6 [shape = 's32[1]{0}', space=sflag, size = 0x4, scoped, tag = 'scoped memory for tpu_custom_call.1']
    #allocation7 [shape = 'u8[8192]{0}', space=vmem, size = 0x2000, scoped, tag = 'input window, operand 2, single buffered']
    #allocation8 [shape = 'u8[4096]{0}', space=vmem, size = 0x1000, scoped, tag = 'output window, operand 0, single buffered']
    #allocation9 [shape = 'u8[4096]{0}', space=vmem, size = 0x1000, scoped, tag = 'output window, operand 1, single buffered']
    #allocation10 [shape = 's32[1]{0}', space=sflag, size = 0x4, scoped, tag = 'scoped memory for tpu_custom_call.1']
    %10 = vsyncpa [#allocation3], 0
    %11 = vsyncpa [#allocation6], 0
    %12 = vsyncpa [#allocation4], 0
    %13 = vsyncpa [#allocation10], 0
    // Predicated region
    $region2: #{tpu_custom_call.1} parent=1 // pred_check
      _
    $region3: #{tpu_custom_call.1} parent=1 // pred_check_branch
      %15 = sbr.rel (0) target = $region5
    $region4: #{tpu_custom_call.1} parent=1 // pred_region
      %s16 = sadd.s32 0, 0
      %p17 = scmp.lt.s32.totalorder %s16, 0
      %s18 = scalar_select %p17, %s16, 0
      %s19 = smul.u32 2, %s18
      %s21 = ssub.s32 256, 256
      %22 = vsyncadd [#allocation3], %s21
      %s23 = smul.addr %s19, 128
      %s24 = scalar_lea.hbm %s0, %s23
      %s25 = sshll.u32 [#allocation2], 4
      %s26 = int_to_ptr.vmem [resolvable:$true] %s25
      %31 = dma.hbm_to_vmem [thread:$0]  %s24, 256, %s26, [#allocation3], 128, 128, 8
    $region5: #{tpu_custom_call.1} parent=1 // pred_fallthru
      _
    // Predicated region
    $region6: #{tpu_custom_call.1} parent=1 // pred_check
      _
    $region7: #{tpu_custom_call.1} parent=1 // pred_check_branch
      %33 = sbr.rel (0) target = $region9
    $region8: #{tpu_custom_call.1} parent=1 // pred_region
      %s34 = sadd.s32 0, 0
      %p35 = scmp.lt.s32.totalorder %s34, 0
      %s36 = scalar_select %p35, %s34, 0
      %s37 = smul.u32 2, %s36
      %s39 = ssub.s32 256, 256
      %40 = vsyncadd [#allocation6], %s39
      %s41 = smul.addr %s37, 128
      %s42 = scalar_lea.hbm %s1, %s41
      %s43 = sshll.u32 [#allocation5], 4
      %s44 = int_to_ptr.vmem [resolvable:$true] %s43
      %49 = dma.hbm_to_vmem [thread:$0]  %s42, 256, %s44, [#allocation6], 128, 128, 8
    $region9: #{tpu_custom_call.1} parent=1 // pred_fallthru
      _
    // Predicated region
    $region10: #{tpu_custom_call.1} parent=1 // pred_check
      _
    $region11: #{tpu_custom_call.1} parent=1 // pred_check_branch
      %51 = sbr.rel (0) target = $region13
    $region12: #{tpu_custom_call.1} parent=1 // pred_region
      %s52 = sadd.s32 0, 0
      %p53 = scmp.lt.s32.totalorder %s52, 0
      %s54 = scalar_select %p53, %s52, 0
      %s55 = smul.u32 2, %s54
      %s57 = ssub.s32 256, 256
      %58 = vsyncadd [#allocation6], %s57
      %s59 = smul.addr %s55, 128
      %s60 = scalar_lea.hbm %s2, %s59
      %s61 = sshll.u32 [#allocation7], 4
      %s62 = int_to_ptr.vmem [resolvable:$true] %s61
      %67 = dma.hbm_to_vmem [thread:$0]  %s60, 256, %s62, [#allocation6], 128, 128, 8
    $region13: #{tpu_custom_call.1} parent=1 // pred_fallthru
      _
    // Predicated region
    $region14: #{tpu_custom_call.1} parent=1 // pred_check
      _
    $region15: #{tpu_custom_call.1} parent=1 // pred_check_branch
      %69 = sbr.rel (0) target = $region17
    $region16: #{tpu_custom_call.1} parent=1 // pred_region
      %70 = dma.done [#allocation3], 256
    $region17: #{tpu_custom_call.1} parent=1 // pred_fallthru
      _
    // Predicated region
    $region18: #{tpu_custom_call.1} parent=1 // pred_check
      _
    $region19: #{tpu_custom_call.1} parent=1 // pred_check_branch
      %72 = sbr.rel (0) target = $region21
    $region20: #{tpu_custom_call.1} parent=1 // pred_region
      %73 = dma.done [#allocation6], 256
    $region21: #{tpu_custom_call.1} parent=1 // pred_fallthru
      _
    // Predicated region
    $region22: #{tpu_custom_call.1} parent=1 // pred_check
      _
    $region23: #{tpu_custom_call.1} parent=1 // pred_check_branch
      %75 = sbr.rel (0) target = $region25
    $region24: #{tpu_custom_call.1} parent=1 // pred_region
      %76 = dma.done [#allocation6], 256
    $region25: #{tpu_custom_call.1} parent=1 // pred_fallthru
      _
    %s77 = sadd.s32 0, 0
    %p78 = scmp.lt.s32.totalorder %s77, 0
    %s79 = scalar_select %p78, %s77, 0
    %s80 = smul.u32 2, %s79
    %s81 = sadd.s32 0, 0
    %p82 = scmp.lt.s32.totalorder %s81, 0
    %s83 = scalar_select %p82, %s81, 0
    %s84 = smul.u32 2, %s83
    %s85 = sadd.s32 0, 0
    %p86 = scmp.lt.s32.totalorder %s85, 0
    %s87 = scalar_select %p86, %s85, 0
    %s88 = smul.u32 2, %s87
    %p89 = scmp.eq.s32.totalorder 0, 0
    // Predicated region
    $region26: #{tpu_custom_call.1} parent=1 // pred_check
      %p90 = pneg %p89
    $region27: #{tpu_custom_call.1} parent=1 // pred_check_branch
      %92 = sbr.rel (%p90) target = $region29
    $region28: #{tpu_custom_call.1} parent=1 // pred_region
      %93 = vst [vmem:[#allocation8] sm:$0xff] 0.0
      %94 = vst [vmem:[#allocation9] sm:$0xff] 0
    $region29: #{tpu_custom_call.1} parent=1 // pred_fallthru
      _
    %s95 = sadd.s32 0, 0
    %s96 = smul.u32 %s95, 16
    %s97 = ssub.s32 16, %s96
    %p98 = scmp.lt.s32.totalorder %s97, 16
    %p99 = scmp.ge.s32.totalorder %s97, 16
    // Predicated region
    $region30: #{tpu_custom_call.1} parent=1 // pred_check
      %p100 = pneg %p99
    $region31: #{tpu_custom_call.1} parent=1 // pred_check_branch
      %102 = sbr.rel (%p100) target = $region33
    $region32: #{tpu_custom_call.1} parent=1 // pred_region
      %v103 = vld [vmem:[#allocation2] sm:$0xff]
      %v104 = vld [vmem:[#allocation2 + $0x8] sm:$0xff]
      %v105 = vld [vmem:[#allocation5] sm:$0xff]
      %v106 = vld [vmem:[#allocation5 + $0x8] sm:$0xff]
      %v107 = vld [vmem:[#allocation7] sm:$0xff]
      %v108 = vld [vmem:[#allocation7 + $0x8] sm:$0xff]
      %v109 = vsub.f32 %v103, %v105
      %v110 = vsub.f32 %v104, %v106
      %v111 = vand.u32 2147483647, %v109
      %v112 = vand.u32 2147483647, %v110
      %v113 = vmul.f32 %v111, %v107
      %v114 = vmul.f32 %v112, %v108
      %vm115 = vcmp.gt.f32.partialorder %v107, 0.0
      %vm116 = vcmp.gt.f32.partialorder %v108, 0.0
      %v117 = vsel %vm115, 1, 0
      %v118 = vsel %vm116, 1, 0
      %v119 = vld [vmem:[#allocation8] sm:$0xff]
      %v120 = vadd.f32 %v113, %v114
      %v121 = vadd.f32 %v119, %v120
      %122 = vst [vmem:[#allocation8] sm:$0xff] %v121
      %v123 = vld [vmem:[#allocation9] sm:$0xff]
      %v124 = vadd.s32 %v117, %v118
      %v125 = vadd.s32 %v123, %v124
      %126 = vst [vmem:[#allocation9] sm:$0xff] %v125
    $region33: #{tpu_custom_call.1} parent=1 // pred_fallthru
      _
    // Predicated region
    $region34: #{tpu_custom_call.1} parent=1 // pred_check
      %p127 = pneg %p98
    $region35: #{tpu_custom_call.1} parent=1 // pred_check_branch
      %129 = sbr.rel (%p127) target = $region37
    $region36: #{tpu_custom_call.1} parent=1 // pred_region
      %v130 = vld [vmem:[#allocation2] sm:$0xff]
      %v131 = vld [vmem:[#allocation2 + $0x8] sm:$0xff]
      %v132 = vld [vmem:[#allocation5] sm:$0xff]
      %v133 = vld [vmem:[#allocation5 + $0x8] sm:$0xff]
      %v134 = vld [vmem:[#allocation7] sm:$0xff]
      %v135 = vld [vmem:[#allocation7 + $0x8] sm:$0xff]
      %v136 = vlaneseq
      %v137 = vshrl.u32 %v136, 7
      %v138 = vadd.s32 %v137, 8
      %v139 = vstv %s97
      %vm140 = vcmp.lt.s32.totalorder %v137, %v139
      %vm141 = vcmp.lt.s32.totalorder %v138, %v139
      %v142 = vsub.f32 %v130, %v132
      %v143 = vsub.f32 %v131, %v133
      %v144 = vand.u32 2147483647, %v142
      %v145 = vand.u32 2147483647, %v143
      %v146 = vmul.f32 %v144, %v134
      %v147 = vmul.f32 %v145, %v135
      %v148 = vsel %vm140, %v146, 0.0
      %v149 = vsel %vm141, %v147, 0.0
      %vm150 = vcmp.gt.f32.partialorder %v134, 0.0
      %vm151 = vcmp.gt.f32.partialorder %v135, 0.0
      %vm152 = vmand %vm140, %vm150
      %vm153 = vmand %vm141, %vm151
      %v154 = vsel %vm152, 1, 0
      %v155 = vsel %vm153, 1, 0
      %v156 = vld [vmem:[#allocation8] sm:$0xff]
      %v157 = vadd.f32 %v148, %v149
      %v158 = vadd.f32 %v156, %v157
      %159 = vst [vmem:[#allocation8] sm:$0xff] %v158
      %v160 = vld [vmem:[#allocation9] sm:$0xff]
      %v161 = vadd.s32 %v154, %v155
      %v162 = vadd.s32 %v160, %v161
      %163 = vst [vmem:[#allocation9] sm:$0xff] %v162
    $region37: #{tpu_custom_call.1} parent=1 // pred_fallthru
      _
    // Predicated region
    $region38: #{tpu_custom_call.1} parent=1 // pred_check
      _
    $region39: #{tpu_custom_call.1} parent=1 // pred_check_branch
      %165 = sbr.rel (0) target = $region41
    $region40: #{tpu_custom_call.1} parent=1 // pred_region
      %s167 = ssub.s32 128, 128
      %168 = vsyncadd [#allocation4], %s167
      %s170 = sshll.u32 [#allocation8], 4
      %s171 = int_to_ptr.vmem [resolvable:$true] %s170
      %173 = dma.vmem_to_hbm [thread:$0]  %s171, 128, %s3, [#allocation4]
    $region41: #{tpu_custom_call.1} parent=1 // pred_fallthru
      _
    // Predicated region
    $region42: #{tpu_custom_call.1} parent=1 // pred_check
      _
    $region43: #{tpu_custom_call.1} parent=1 // pred_check_branch
      %175 = sbr.rel (0) target = $region45
    $region44: #{tpu_custom_call.1} parent=1 // pred_region
      %s177 = ssub.s32 128, 128
      %178 = vsyncadd [#allocation10], %s177
      %s180 = sshll.u32 [#allocation9], 4
      %s181 = int_to_ptr.vmem [resolvable:$true] %s180
      %183 = dma.vmem_to_hbm [thread:$0]  %s181, 128, %s4, [#allocation10]
    $region45: #{tpu_custom_call.1} parent=1 // pred_fallthru
      _
    // Predicated region
    $region46: #{tpu_custom_call.1} parent=1 // pred_check
      _
    $region47: #{tpu_custom_call.1} parent=1 // pred_check_branch
      %185 = sbr.rel (0) target = $region49
    $region48: #{tpu_custom_call.1} parent=1 // pred_region
      %186 = dma.done [#allocation4], 128
    $region49: #{tpu_custom_call.1} parent=1 // pred_fallthru
      _
    // Predicated region
    $region50: #{tpu_custom_call.1} parent=1 // pred_check
      _
    $region51: #{tpu_custom_call.1} parent=1 // pred_check_branch
      %188 = sbr.rel (0) target = $region53
    $region52: #{tpu_custom_call.1} parent=1 // pred_region
      %189 = dma.done [#allocation10], 128
    $region53: #{tpu_custom_call.1} parent=1 // pred_fallthru
      _
    %190 = vsyncpa [#allocation3], 1
    %191 = vsyncpa [#allocation6], 1
    %192 = vsyncpa [#allocation4], 1
    %193 = vsyncpa [#allocation10], 1

</llo_original>
